<compile_context>
chip_gen: v5e
topology: v5e:2x2
jax: 0.10.0
libtpu: 0.0.40
codegen_flags: <defaults>
</compile_context>

<pallas_src>
import jax
import jax.numpy as jnp
from jax.experimental import pallas as pl
from jax.experimental.pallas import tpu as pltpu

LANE = 128


def _round_up(x, m):
    return ((x + m - 1) // m) * m


def _pad2(a, rows, cols, dtype=None):
    """Zero-pad a 2-D array to (rows, cols), optionally casting dtype."""
    dt = a.dtype if dtype is None else dtype
    out = jnp.zeros((rows, cols), dt)
    return out.at[: a.shape[0], : a.shape[1]].set(a.astype(dt))


def _pick_tile(n_pad, candidates):
    """Largest candidate tile that divides n_pad (n_pad is a multiple of 128)."""
    for c in candidates:
        if c <= n_pad and n_pad % c == 0:
            return c
    return n_pad


def _vmem_cap_bytes():
    """Physical VMEM per core; falls back to the smallest (v7x) if unknown."""
    try:
        return int(pltpu.get_tpu_info().vmem_capacity_bytes)
    except Exception:
        return 64 << 20


def _vmem_limit(block_bytes_sum, cap):
    """Actual block footprint + headroom, capped at 75% of physical VMEM."""
    budget = (cap * 3) // 4
    return int(min(max(int(block_bytes_sum) + (2 << 20), 8 << 20), budget))


# --------------------------- Pallas kernels ---------------------------------


def gcn_layer1_kernel(a_ref, xw1_ref, b1_ref, w2d_ref, g_ref, acc_ref):
    """acc += A_tile @ XW1_tile;  at last k: G = relu(acc + b1) @ W2d (bf16)."""
    k = pl.program_id(1)

    @pl.when(k == 0)
    def _():
        acc_ref[...] = jnp.zeros_like(acc_ref)

    acc_ref[...] += jnp.dot(a_ref[...], xw1_ref[...],
                            preferred_element_type=jnp.float32)

    @pl.when(k == pl.num_programs(1) - 1)
    def _():
        h = jnp.maximum(acc_ref[...] + b1_ref[...], 0.0)
        g = jnp.dot(h.astype(jnp.bfloat16), w2d_ref[...],
                    preferred_element_type=jnp.float32)
        g_ref[...] = g.astype(jnp.bfloat16)


def gcn_layer2_kernel(a_ref, g_ref, b2d_ref, o_ref, acc_ref):
    """acc += A_tile @ G_tile;  at last k: X_hat = acc + b2d (f32)."""
    k = pl.program_id(1)

    @pl.when(k == 0)
    def _():
        acc_ref[...] = jnp.zeros_like(acc_ref)

    acc_ref[...] += jnp.dot(a_ref[...], g_ref[...],
                            preferred_element_type=jnp.float32)

    @pl.when(k == pl.num_programs(1) - 1)
    def _():
        o_ref[...] = acc_ref[...] + b2d_ref[...]


# --------------------------- plain-JAX glue ----------------------------------


def gcn_normalized_adjacency(edge_index, num_nodes, num_padded):
    """Dense A_hat = D^-1/2 (A + I) D^-1/2 built directly at padded size, bf16.

    Uses .add (not .set) so duplicate/parallel edges accumulate one message
    per edge, like torch_geometric's scatter-add aggregation; self-loops are
    added for real nodes only, so padded rows/cols stay exactly zero.
    """
    src, dst = edge_index[0], edge_index[1]
    adj = jnp.zeros((num_padded, num_padded), jnp.float32)
    adj = adj.at[dst, src].add(1.0)                      # A[i, j] += (j -> i)
    real = (jnp.arange(num_padded) < num_nodes).astype(jnp.float32)
    adj = adj + jnp.diag(real)                           # self loops (real nodes)
    deg = jnp.sum(adj, axis=1)
    dinv = jnp.where(deg > 0.0, jax.lax.rsqrt(deg), 0.0)
    return (adj * dinv[:, None] * dinv[None, :]).astype(jnp.bfloat16)


def gnn_autoencoder(x, edge_index, params):
    """x: [N, in_channels] float32; edge_index: [2, E] int32."""
    n, fin = x.shape
    hid = params["w1"].shape[1]

    f_pad = _round_up(fin, LANE)
    h_pad = _round_up(hid, LANE)
    n_pad = _round_up(n, LANE)            # pad to 128, never to the row tile

    vmem_cap = _vmem_cap_bytes()
    big_vmem = vmem_cap >= (100 << 20)    # v5e / v6e (128 MiB) vs v7x (64 MiB)
    tm = _pick_tile(n_pad, (512, 256, 128))
    tk_cands = (4096, 2048, 1024, 512, 256, 128) if big_vmem else (2048, 1024,
                                                                   512, 256, 128)
    tk = _pick_tile(n_pad, tk_cands)
    grid = (n_pad // tm, n_pad // tk)

    # ---- offline folds (exact, modulo bf16 rounding of the fused weights) ---
    # layer 1:  H = relu(A_hat @ (X @ W1) + b1)
    # layer 2 + decoder:  X_hat = A_hat @ (H @ (W2 @ Wd)) + (b2 @ Wd + bd)
    xw1 = _pad2(x.astype(jnp.float32) @ params["w1"], n_pad, h_pad, jnp.bfloat16)
    b1 = _pad2(params["b1"], 1, h_pad, jnp.float32)
    w2d = _pad2(params["w2"] @ params["wd"], h_pad, f_pad, jnp.bfloat16)
    b2d = _pad2(params["b2"] @ params["wd"] + params["bd"], 1, f_pad, jnp.float32)

    a_hat = gcn_normalized_adjacency(edge_index, n, n_pad)   # (n_pad, n_pad) bf16

    a_spec = pl.BlockSpec((tm, tk), lambda i, k: (i, k))
    k_spec = lambda cols: pl.BlockSpec((tk, cols), lambda i, k: (k, 0))
    row_spec = lambda cols: pl.BlockSpec((tm, cols), lambda i, k: (i, 0))
    resident = lambda shape: pl.BlockSpec(shape, lambda i, k: (0,) * len(shape))

    # ---- layer 1: G = relu(A_hat @ XW1 + b1) @ W2d ---------------------------
    l1_bytes = (2 * tm * tk * 2            # A tile (double-buffered, bf16)
                + 2 * tk * h_pad * 2       # XW1 tile (double-buffered, bf16)
                + 2 * h_pad * 4            # b1
                + 2 * h_pad * f_pad * 2    # W2d
                + 2 * tm * f_pad * 2       # G output tile
                + tm * h_pad * 4)          # f32 accumulator scratch
    l1_cost = pl.CostEstimate(
        flops=2 * n_pad * n_pad * h_pad + 2 * n_pad * h_pad * f_pad,
        transcendentals=0,
        bytes_accessed=n_pad * n_pad * 2 + n_pad * h_pad * 2
        + h_pad * f_pad * 2 + n_pad * f_pad * 2)

    g = pl.pallas_call(
        gcn_layer1_kernel,
        out_shape=jax.ShapeDtypeStruct((n_pad, f_pad), jnp.bfloat16),
        grid=grid,
        in_specs=[a_spec,                  # A_hat (tm, tk) tile
                  k_spec(h_pad),           # XW1   (tk, h_pad) tile
                  resident((1, h_pad)),    # b1
                  resident((h_pad, f_pad))],  # W2d
        out_specs=row_spec(f_pad),
        scratch_shapes=[pltpu.VMEM((tm, h_pad), jnp.float32)],
        compiler_params=pltpu.CompilerParams(
            dimension_semantics=("parallel", "arbitrary"),
            vmem_limit_bytes=_vmem_limit(l1_bytes, vmem_cap)),
        cost_estimate=l1_cost,
    )(a_hat, xw1, b1, w2d)

    # ---- layer 2 (+ folded decoder): X_hat = A_hat @ G + b2d -----------------
    l2_bytes = (2 * tm * tk * 2            # A tile
                + 2 * tk * f_pad * 2       # G tile
                + 2 * f_pad * 4            # b2d
                + 2 * tm * f_pad * 4       # f32 output tile
                + tm * f_pad * 4)          # f32 accumulator scratch
    l2_cost = pl.CostEstimate(
        flops=2 * n_pad * n_pad * f_pad,
        transcendentals=0,
        bytes_accessed=n_pad * n_pad * 2 + n_pad * f_pad * 2
        + n_pad * f_pad * 4)

    x_hat_pad = pl.pallas_call(
        gcn_layer2_kernel,
        out_shape=jax.ShapeDtypeStruct((n_pad, f_pad), jnp.float32),
        grid=grid,
        in_specs=[a_spec,                  # A_hat (tm, tk) tile
                  k_spec(f_pad),           # G     (tk, f_pad) tile
                  resident((1, f_pad))],   # b2d
        out_specs=row_spec(f_pad),
        scratch_shapes=[pltpu.VMEM((tm, f_pad), jnp.float32)],
        compiler_params=pltpu.CompilerParams(
            dimension_semantics=("parallel", "arbitrary"),
            vmem_limit_bytes=_vmem_limit(l2_bytes, vmem_cap)),
        cost_estimate=l2_cost,
    )(a_hat, g, b2d)

    return x_hat_pad[:n, :fin]


def init_params(key, in_channels, hidden_channels, out_channels):
    """Deterministic synthetic init (glorot-ish); biases zero like PyG GCNConv.

    Note: decoder weight is stored pre-transposed ([out_channels, in_channels])
    relative to torch.nn.Linear.weight — transpose when importing real weights.
    """
    k1, k2, k3 = jax.random.split(key, 3)

    def glorot(k, fan_in, fan_out):
        s = jnp.sqrt(6.0 / (fan_in + fan_out))
        return jax.random.uniform(k, (fan_in, fan_out), jnp.float32, -s, s)

    return {
        "w1": glorot(k1, in_channels, hidden_channels),
        "b1": jnp.zeros((1, hidden_channels), jnp.float32),
        "w2": glorot(k2, hidden_channels, out_channels),
        "b2": jnp.zeros((1, out_channels), jnp.float32),
        "wd": glorot(k3, out_channels, in_channels),
        "bd": jnp.zeros((1, in_channels), jnp.float32),
    }


def _reference(x, edge_index, params):
    """Pure-JAX f32 reference of the PyTorch forward (for a tolerance check)."""
    n = x.shape[0]
    src, dst = edge_index[0], edge_index[1]
    adj = jnp.zeros((n, n), jnp.float32).at[dst, src].add(1.0) + jnp.eye(n)
    deg = jnp.sum(adj, axis=1)
    dinv = jnp.where(deg > 0, jax.lax.rsqrt(deg), 0.0)
    a_hat = adj * dinv[:, None] * dinv[None, :]
    h = jnp.maximum(a_hat @ x @ params["w1"] + params["b1"], 0.0)
    z = a_hat @ h @ params["w2"] + params["b2"]
    return z @ params["wd"] + params["bd"]


if __name__ == "__main__":
    IN_CHANNELS, HIDDEN_CHANNELS, OUT_CHANNELS = 8, 32, 16
    NUM_NODES, NUM_EDGES = 16, 40

    key = jax.random.PRNGKey(0)
    kx, ke, kp = jax.random.split(key, 3)

    x = jax.random.normal(kx, (NUM_NODES, IN_CHANNELS), dtype=jnp.float32)
    edge_index = jax.random.randint(ke, (2, NUM_EDGES), 0, NUM_NODES,
                                    dtype=jnp.int32)
    params = init_params(kp, IN_CHANNELS, HIDDEN_CHANNELS, OUT_CHANNELS)

    x_hat = gnn_autoencoder(x, edge_index, params)
    jax.block_until_ready(x_hat)

    assert x_hat.shape == (NUM_NODES, IN_CHANNELS)
    assert bool(jnp.all(jnp.isfinite(x_hat)))

    ref = _reference(x, edge_index, params)
    max_err = float(jnp.max(jnp.abs(x_hat - ref)))
    scale = float(jnp.max(jnp.abs(ref))) + 1.0
    assert max_err < 0.05 * scale, f"max_err={max_err} vs ref scale={scale}"

    print("KERNEL_OK")
</pallas_src>

<mosaic_0001>
module attributes {stable_mosaic.version = 11 : i64} {
  func.func @gcn_layer1_kernel(%arg0: i32, %arg1: i32, %arg2: memref<128x128xbf16, #tpu.memory_space<vmem>>, %arg3: memref<128x128xbf16, #tpu.memory_space<vmem>>, %arg4: memref<1x128xf32, #tpu.memory_space<vmem>>, %arg5: memref<128x128xbf16, #tpu.memory_space<vmem>>, %arg6: memref<128x128xbf16, #tpu.memory_space<vmem>>, %arg7: memref<128x128xf32, #tpu.memory_space<vmem>>) attributes {dimension_semantics = [#tpu.dimension_semantics<parallel>, #tpu.dimension_semantics<arbitrary>], iteration_bounds = array<i64: 1, 1>, scalar_prefetch = 0 : i64, scratch_operands = 1 : i64, tpu.core_type = #tpu.core_type<tc>, window_params = [{transform_indices = @transform_0, window_bounds = array<i64: 128, 128>}, {transform_indices = @transform_1, window_bounds = array<i64: 128, 128>}, {pipeline_mode = #tpu.pipeline_mode<synchronous>, transform_indices = @transform_2, window_bounds = array<i64: 1, 128>}, {pipeline_mode = #tpu.pipeline_mode<synchronous>, transform_indices = @transform_3, window_bounds = array<i64: 128, 128>}, {transform_indices = @transform_4, window_bounds = array<i64: 128, 128>}]} {
    %c0_i32 = arith.constant 0 : i32
    %0 = arith.cmpi eq, %arg1, %c0_i32 : i32
    %1 = arith.extui %0 : i1 to i32
    %c0_i32_0 = arith.constant 0 : i32
    %2 = arith.cmpi ne, %1, %c0_i32_0 : i32
    scf.if %2 {
      %cst_10 = arith.constant 0.000000e+00 : f32
      %12 = vector.broadcast %cst_10 : f32 to vector<128x128xf32>
      %c0_11 = arith.constant 0 : index
      %c0_12 = arith.constant 0 : index
      %13 = vector.load %arg7[%c0_11, %c0_12] : memref<128x128xf32, #tpu.memory_space<vmem>>, vector<128x128xf32>
      tpu.vector_store %arg7[%c0_11, %c0_12], %12 {strides = array<i32>} : memref<128x128xf32, #tpu.memory_space<vmem>>, vector<128x128xf32>,
    } else {
    }
    %c0 = arith.constant 0 : index
    %c0_1 = arith.constant 0 : index
    %3 = vector.load %arg7[%c0, %c0_1] : memref<128x128xf32, #tpu.memory_space<vmem>>, vector<128x128xf32>
    %c0_2 = arith.constant 0 : index
    %c0_3 = arith.constant 0 : index
    %4 = vector.load %arg2[%c0_2, %c0_3] : memref<128x128xbf16, #tpu.memory_space<vmem>>, vector<128x128xbf16>
    %c0_4 = arith.constant 0 : index
    %c0_5 = arith.constant 0 : index
    %5 = vector.load %arg3[%c0_4, %c0_5] : memref<128x128xbf16, #tpu.memory_space<vmem>>, vector<128x128xbf16>
    %cst = arith.constant dense<0.000000e+00> : vector<128x128xf32>
    %6 = tpu.matmul %4, %5, %cst {dimension_numbers = #tpu.dot_dimension_numbers<[1], [0], [0], [1], [0, 0, 1, 1], [], []>} : vector<128x128xbf16>, vector<128x128xbf16>, vector<128x128xf32> -> vector<128x128xf32>
    %7 = arith.addf %3, %6 : vector<128x128xf32>
    %c0_6 = arith.constant 0 : index
    %c0_7 = arith.constant 0 : index
    %8 = vector.load %arg7[%c0_6, %c0_7] : memref<128x128xf32, #tpu.memory_space<vmem>>, vector<128x128xf32>
    tpu.vector_store %arg7[%c0_6, %c0_7], %7 {strides = array<i32>} : memref<128x128xf32, #tpu.memory_space<vmem>>, vector<128x128xf32>,
    %c0_i32_8 = arith.constant 0 : i32
    %9 = arith.cmpi eq, %arg1, %c0_i32_8 : i32
    %10 = arith.extui %9 : i1 to i32
    %c0_i32_9 = arith.constant 0 : i32
    %11 = arith.cmpi ne, %10, %c0_i32_9 : i32
    scf.if %11 {
      %c0_10 = arith.constant 0 : index
      %c0_11 = arith.constant 0 : index
      %12 = vector.load %arg7[%c0_10, %c0_11] : memref<128x128xf32, #tpu.memory_space<vmem>>, vector<128x128xf32>
      %c0_12 = arith.constant 0 : index
      %c0_13 = arith.constant 0 : index
      %13 = vector.load %arg4[%c0_12, %c0_13] : memref<1x128xf32, #tpu.memory_space<vmem>>, vector<1x128xf32>
      %14 = vector.broadcast %13 : vector<1x128xf32> to vector<128x128xf32>
      %15 = arith.addf %12, %14 : vector<128x128xf32>
      %cst_14 = arith.constant 0.000000e+00 : f32
      %16 = vector.broadcast %cst_14 : f32 to vector<128x128xf32>
      %17 = arith.maximumf %15, %16 : vector<128x128xf32>
      %18 = arith.truncf %17 : vector<128x128xf32> to vector<128x128xbf16>
      %c0_15 = arith.constant 0 : index
      %c0_16 = arith.constant 0 : index
      %19 = vector.load %arg5[%c0_15, %c0_16] : memref<128x128xbf16, #tpu.memory_space<vmem>>, vector<128x128xbf16>
      %cst_17 = arith.constant dense<0.000000e+00> : vector<128x128xf32>
      %20 = tpu.matmul %18, %19, %cst_17 {dimension_numbers = #tpu.dot_dimension_numbers<[1], [0], [0], [1], [0, 0, 1, 1], [], []>} : vector<128x128xbf16>, vector<128x128xbf16>, vector<128x128xf32> -> vector<128x128xf32>
      %21 = arith.truncf %20 : vector<128x128xf32> to vector<128x128xbf16>
      %c0_18 = arith.constant 0 : index
      %c0_19 = arith.constant 0 : index
      %22 = vector.load %arg6[%c0_18, %c0_19] : memref<128x128xbf16, #tpu.memory_space<vmem>>, vector<128x128xbf16>
      tpu.vector_store %arg6[%c0_18, %c0_19], %21 {strides = array<i32>} : memref<128x128xbf16, #tpu.memory_space<vmem>>, vector<128x128xbf16>,
    } else {
    }
    return
  }
  func.func @transform_0(%arg0: i32, %arg1: i32) -> (i32, i32) {
    %c0_i32 = arith.constant 0 : i32
    return %arg0, %arg1 : i32, i32
  }
  func.func @transform_1(%arg0: i32, %arg1: i32) -> (i32, i32) {
    %c0_i32 = arith.constant 0 : i32
    %c0_i32_0 = arith.constant 0 : i32
    return %arg1, %c0_i32 : i32, i32
  }
  func.func @transform_2(%arg0: i32, %arg1: i32) -> (i32, i32) {
    %c0_i32 = arith.constant 0 : i32
    %c0_i32_0 = arith.constant 0 : i32
    %c0_i32_1 = arith.constant 0 : i32
    return %c0_i32, %c0_i32_0 : i32, i32
  }
  func.func @transform_3(%arg0: i32, %arg1: i32) -> (i32, i32) {
    %c0_i32 = arith.constant 0 : i32
    %c0_i32_0 = arith.constant 0 : i32
    %c0_i32_1 = arith.constant 0 : i32
    return %c0_i32, %c0_i32_0 : i32, i32
  }
  func.func @transform_4(%arg0: i32, %arg1: i32) -> (i32, i32) {
    %c0_i32 = arith.constant 0 : i32
    %c0_i32_0 = arith.constant 0 : i32
    return %arg0, %c0_i32 : i32, i32
  }
}

</mosaic_0001>

<llo_original>
// kernel: tpu_custom_call.1
$region0: #{tpu_custom_call.1}
  #allocation0 [shape = 'u32[]', space=smem, size = 0x4, offset = 0x4, fixed_abs, tag = 'smem constant byte address 0x4 - core index']
  #allocation1 [shape = 'u32[72,128]{1,0:T(1,128)}', space=vmem, size = 0x9000, scoped, tag = 'internal scratch']
  #allocation2 [shape = 'f32[128,128]{1,0:T(8,128)}', space=vmem, size = 0x10000, scoped, tag = 'scratch operand']
  %s0 = inlined_call_operand.hbm [shape: bf16[128,128], index: 0, kind: input, shape index: {}]
  %s1 = inlined_call_operand.hbm [shape: bf16[128,128], index: 1, kind: input, shape index: {}]
  %s2 = inlined_call_operand.vmem [shape: f32[1,128], index: 2, kind: input, shape index: {}]
  %s3 = inlined_call_operand.hbm [shape: bf16[128,128], index: 3, kind: input, shape index: {}]
  %s4 = inlined_call_operand.hbm [shape: bf16[128,128], index: 4, kind: output, shape index: {}]
  %s5 = sld [smem:[#allocation0]]
  $region46: #{tpu_custom_call.1} parent=0
    _
  %s7 = ssub.s32 1, %s5
  %s8 = scalar_select 0, %s7, %s5
  $region1: #{tpu_custom_call.1} parent=0
    #allocation3 [shape = 'u8[32768]{0}', space=vmem, size = 0x8000, scoped, tag = 'input window, operand 0, single buffered']
    #allocation4 [shape = 's32[1]{0}', space=sflag, size = 0x4, scoped, tag = 'scoped memory for tpu_custom_call.1']
    #allocation5 [shape = 's32[1]{0}', space=sflag, size = 0x4, scoped, tag = 'scoped memory for tpu_custom_call.1']
    #allocation6 [shape = 'u8[32768]{0}', space=vmem, size = 0x8000, scoped, tag = 'input window, operand 1, single buffered']
    #allocation7 [shape = 's32[1]{0}', space=sflag, size = 0x4, scoped, tag = 'scoped memory for tpu_custom_call.1']
    #allocation8 [shape = 'u8[32768]{0}', space=vmem, size = 0x8000, scoped, tag = 'input window, operand 3, single buffered']
    #allocation9 [shape = 'u8[32768]{0}', space=vmem, size = 0x8000, scoped, tag = 'output window, operand 0, single buffered']
    %9 = vsyncpa [#allocation4], 0
    %10 = vsyncpa [#allocation7], 0
    %11 = vsyncpa [#allocation5], 0
    // Predicated region
    $region2: #{tpu_custom_call.1} parent=1 // pred_check
      _
    $region3: #{tpu_custom_call.1} parent=1 // pred_check_branch
      %13 = sbr.rel (0) target = $region5
    $region4: #{tpu_custom_call.1} parent=1 // pred_region
      %15 = vsyncadd [#allocation4], 0
      %s16 = sshll.u32 %s0, 4
      %s17 = int_to_ptr.hbm [resolvable:$true] %s16
      %s18 = sshll.u32 [#allocation3], 4
      %s19 = int_to_ptr.vmem [resolvable:$true] %s18
      %24 = dma.hbm_to_vmem [thread:$0]  %s17, 1024, %s19, [#allocation4], 64, 64, 4
    $region5: #{tpu_custom_call.1} parent=1 // pred_fallthru
      _
    // Predicated region
    $region6: #{tpu_custom_call.1} parent=1 // pred_check
      _
    $region7: #{tpu_custom_call.1} parent=1 // pred_check_branch
      %26 = sbr.rel (0) target = $region9
    $region8: #{tpu_custom_call.1} parent=1 // pred_region
      %28 = vsyncadd [#allocation7], 0
      %s29 = sshll.u32 %s1, 4
      %s30 = int_to_ptr.hbm [resolvable:$true] %s29
      %s31 = sshll.u32 [#allocation6], 4
      %s32 = int_to_ptr.vmem [resolvable:$true] %s31
      %37 = dma.hbm_to_vmem [thread:$0]  %s30, 1024, %s32, [#allocation7], 64, 64, 4
    $region9: #{tpu_custom_call.1} parent=1 // pred_fallthru
      _
    // Predicated region
    $region10: #{tpu_custom_call.1} parent=1 // pred_check
      _
    $region11: #{tpu_custom_call.1} parent=1 // pred_check_branch
      %39 = sbr.rel (0) target = $region13
    $region12: #{tpu_custom_call.1} parent=1 // pred_region
      _
    $region13: #{tpu_custom_call.1} parent=1 // pred_fallthru
      _
    // Predicated region
    $region14: #{tpu_custom_call.1} parent=1 // pred_check
      _
    $region15: #{tpu_custom_call.1} parent=1 // pred_check_branch
      %41 = sbr.rel (0) target = $region17
    $region16: #{tpu_custom_call.1} parent=1 // pred_region
      %43 = vsyncadd [#allocation7], 0
      %s44 = sshll.u32 %s3, 4
      %s45 = int_to_ptr.hbm [resolvable:$true] %s44
      %s46 = sshll.u32 [#allocation8], 4
      %s47 = int_to_ptr.vmem [resolvable:$true] %s46
      %52 = dma.hbm_to_vmem [thread:$0]  %s45, 1024, %s47, [#allocation7], 64, 64, 4
    $region17: #{tpu_custom_call.1} parent=1 // pred_fallthru
      _
    // Predicated region
    $region18: #{tpu_custom_call.1} parent=1 // pred_check
      _
    $region19: #{tpu_custom_call.1} parent=1 // pred_check_branch
      %54 = sbr.rel (0) target = $region21
    $region20: #{tpu_custom_call.1} parent=1 // pred_region
      %56 = dma.done [#allocation4], 1024
    $region21: #{tpu_custom_call.1} parent=1 // pred_fallthru
      _
    // Predicated region
    $region22: #{tpu_custom_call.1} parent=1 // pred_check
      _
    $region23: #{tpu_custom_call.1} parent=1 // pred_check_branch
      %58 = sbr.rel (0) target = $region25
    $region24: #{tpu_custom_call.1} parent=1 // pred_region
      %60 = dma.done [#allocation7], 1024
    $region25: #{tpu_custom_call.1} parent=1 // pred_fallthru
      _
    // Predicated region
    $region26: #{tpu_custom_call.1} parent=1 // pred_check
      _
    $region27: #{tpu_custom_call.1} parent=1 // pred_check_branch
      %62 = sbr.rel (0) target = $region29
    $region28: #{tpu_custom_call.1} parent=1 // pred_region
      %64 = dma.done [#allocation7], 1024
    $region29: #{tpu_custom_call.1} parent=1 // pred_fallthru
      _
    %p65 = scmp.eq.s32.totalorder 0, 0
    // Predicated region
    $region30: #{tpu_custom_call.1} parent=1 // pred_check
      %p66 = pneg %p65
    $region31: #{tpu_custom_call.1} parent=1 // pred_check_branch
      %68 = sbr.rel (%p66) target = $region33
    $region32: #{tpu_custom_call.1} parent=1 // pred_region
      %69 = vst [vmem:[#allocation2] sm:$0xff] 0.0
      %70 = vst [vmem:[#allocation2 + $0x8] sm:$0xff] 0.0
      %71 = vst [vmem:[#allocation2 + $0x10] sm:$0xff] 0.0
      %72 = vst [vmem:[#allocation2 + $0x18] sm:$0xff] 0.0
      %73 = vst [vmem:[#allocation2 + $0x20] sm:$0xff] 0.0
      %74 = vst [vmem:[#allocation2 + $0x28] sm:$0xff] 0.0
      %75 = vst [vmem:[#allocation2 + $0x30] sm:$0xff] 0.0
      %76 = vst [vmem:[#allocation2 + $0x38] sm:$0xff] 0.0
      %77 = vst [vmem:[#allocation2 + $0x40] sm:$0xff] 0.0
      %78 = vst [vmem:[#allocation2 + $0x48] sm:$0xff] 0.0
      %79 = vst [vmem:[#allocation2 + $0x50] sm:$0xff] 0.0
      %80 = vst [vmem:[#allocation2 + $0x58] sm:$0xff] 0.0
      %81 = vst [vmem:[#allocation2 + $0x60] sm:$0xff] 0.0
      %82 = vst [vmem:[#allocation2 + $0x68] sm:$0xff] 0.0
      %83 = vst [vmem:[#allocation2 + $0x70] sm:$0xff] 0.0
      %84 = vst [vmem:[#allocation2 + $0x78] sm:$0xff] 0.0
    $region33: #{tpu_custom_call.1} parent=1 // pred_fallthru
      _
    %v85 = vld [vmem:[#allocation2] sm:$0xff]
    %v86 = vld [vmem:[#allocation2 + $0x8] sm:$0xff]
    %v87 = vld [vmem:[#allocation2 + $0x10] sm:$0xff]
    %v88 = vld [vmem:[#allocation2 + $0x18] sm:$0xff]
    %v89 = vld [vmem:[#allocation2 + $0x20] sm:$0xff]
    %v90 = vld [vmem:[#allocation2 + $0x28] sm:$0xff]
    %v91 = vld [vmem:[#allocation2 + $0x30] sm:$0xff]
    %v92 = vld [vmem:[#allocation2 + $0x38] sm:$0xff]
    %v93 = vld [vmem:[#allocation2 + $0x40] sm:$0xff]
    %v94 = vld [vmem:[#allocation2 + $0x48] sm:$0xff]
    %v95 = vld [vmem:[#allocation2 + $0x50] sm:$0xff]
    %v96 = vld [vmem:[#allocation2 + $0x58] sm:$0xff]
    %v97 = vld [vmem:[#allocation2 + $0x60] sm:$0xff]
    %v98 = vld [vmem:[#allocation2 + $0x68] sm:$0xff]
    %v99 = vld [vmem:[#allocation2 + $0x70] sm:$0xff]
    %v100 = vld [vmem:[#allocation2 + $0x78] sm:$0xff]
    %v101 = vld [vmem:[#allocation3] sm:$0xf]
    %v102 = vld [vmem:[#allocation3 + $0x4] sm:$0xf]
    %v103 = vld [vmem:[#allocation3 + $0x8] sm:$0xf]
    %v104 = vld [vmem:[#allocation3 + $0xc] sm:$0xf]
    %v105 = vld [vmem:[#allocation3 + $0x10] sm:$0xf]
    %v106 = vld [vmem:[#allocation3 + $0x14] sm:$0xf]
    %v107 = vld [vmem:[#allocation3 + $0x18] sm:$0xf]
    %v108 = vld [vmem:[#allocation3 + $0x1c] sm:$0xf]
    %v109 = vld [vmem:[#allocation3 + $0x20] sm:$0xf]
    %v110 = vld [vmem:[#allocation3 + $0x24] sm:$0xf]
    %v111 = vld [vmem:[#allocation3 + $0x28] sm:$0xf]
    %v112 = vld [vmem:[#allocation3 + $0x2c] sm:$0xf]
    %v113 = vld [vmem:[#allocation3 + $0x30] sm:$0xf]
    %v114 = vld [vmem:[#allocation3 + $0x34] sm:$0xf]
    %v115 = vld [vmem:[#allocation3 + $0x38] sm:$0xf]
    %v116 = vld [vmem:[#allocation3 + $0x3c] sm:$0xf]
    %v117 = vld [vmem:[#allocation6] sm:$0xf]
    %v118 = vld [vmem:[#allocation6 + $0x4] sm:$0xf]
    %v119 = vld [vmem:[#allocation6 + $0x8] sm:$0xf]
    %v120 = vld [vmem:[#allocation6 + $0xc] sm:$0xf]
    %v121 = vld [vmem:[#allocation6 + $0x10] sm:$0xf]
    %v122 = vld [vmem:[#allocation6 + $0x14] sm:$0xf]
    %v123 = vld [vmem:[#allocation6 + $0x18] sm:$0xf]
    %v124 = vld [vmem:[#allocation6 + $0x1c] sm:$0xf]
    %v125 = vld [vmem:[#allocation6 + $0x20] sm:$0xf]
    %v126 = vld [vmem:[#allocation6 + $0x24] sm:$0xf]
    %v127 = vld [vmem:[#allocation6 + $0x28] sm:$0xf]
    %v128 = vld [vmem:[#allocation6 + $0x2c] sm:$0xf]
    %v129 = vld [vmem:[#allocation6 + $0x30] sm:$0xf]
    %v130 = vld [vmem:[#allocation6 + $0x34] sm:$0xf]
    %v131 = vld [vmem:[#allocation6 + $0x38] sm:$0xf]
    %v132 = vld [vmem:[#allocation6 + $0x3c] sm:$0xf]
    %v149 = vunpack.c.l.b16 %v101
    %v150 = vunpack.c.l.b16 %v102
    %v151 = vunpack.c.l.b16 %v103
    %v152 = vunpack.c.l.b16 %v104
    %v153 = vunpack.c.l.b16 %v105
    %v154 = vunpack.c.l.b16 %v106
    %v155 = vunpack.c.l.b16 %v107
    %v156 = vunpack.c.l.b16 %v108
    %v157 = vunpack.c.l.b16 %v109
    %v158 = vunpack.c.l.b16 %v110
    %v159 = vunpack.c.l.b16 %v111
    %v160 = vunpack.c.l.b16 %v112
    %v161 = vunpack.c.l.b16 %v113
    %v162 = vunpack.c.l.b16 %v114
    %v163 = vunpack.c.l.b16 %v115
    %v164 = vunpack.c.l.b16 %v116
    %v165 = vpack.c.b16 %v150, %v149
    %v166 = vpack.c.b16 %v152, %v151
    %v167 = vpack.c.b16 %v154, %v153
    %v168 = vpack.c.b16 %v156, %v155
    %v169 = vpack.c.b16 %v158, %v157
    %v170 = vpack.c.b16 %v160, %v159
    %v171 = vpack.c.b16 %v162, %v161
    %v172 = vpack.c.b16 %v164, %v163
    %v197 = vunpack.c.l.b16 %v117
    %v198 = vunpack.c.l.b16 %v118
    %v199 = vunpack.c.l.b16 %v119
    %v200 = vunpack.c.l.b16 %v120
    %v201 = vunpack.c.l.b16 %v121
    %v202 = vunpack.c.l.b16 %v122
    %v203 = vunpack.c.l.b16 %v123
    %v204 = vunpack.c.l.b16 %v124
    %v205 = vunpack.c.l.b16 %v125
    %v206 = vunpack.c.l.b16 %v126
    %v207 = vunpack.c.l.b16 %v127
    %v208 = vunpack.c.l.b16 %v128
    %v209 = vunpack.c.l.b16 %v129
    %v210 = vunpack.c.l.b16 %v130
    %v211 = vunpack.c.l.b16 %v131
    %v212 = vunpack.c.l.b16 %v132
    %v213 = vpack.c.b16 %v198, %v197
    %v214 = vpack.c.b16 %v200, %v199
    %v215 = vpack.c.b16 %v202, %v201
    %v216 = vpack.c.b16 %v204, %v203
    %v217 = vpack.c.b16 %v206, %v205
    %v218 = vpack.c.b16 %v208, %v207
    %v219 = vpack.c.b16 %v210, %v209
    %v220 = vpack.c.b16 %v212, %v211
    %229 = vmatpush.bf16.msra.mxu0 %v220
    %230 = vmatpush.bf16.msra.mxu0 %v219
    %231 = vmatpush.bf16.msra.mxu0 %v218
    %232 = vmatpush.bf16.msra.mxu0 %v217
    %233 = vmatpush.bf16.msra.mxu0 %v216
    %234 = vmatpush.bf16.msra.mxu0 %v215
    %235 = vmatpush.bf16.msra.mxu0 %v214
    %236 = vmatpush.bf16.msra.mxu0 %v213
    %237 = vmatmul.bf16.gmra.mxu0 %v165
    %v238 = vpop.f32.mrf.mxu0
    %v239 = vadd.f32 0.0, %v238
    %v240 = vpop.f32.mrf.mxu0
    %v241 = vadd.f32 0.0, %v240
    %242 = vmatmul.bf16.gmra.mxu0 %v166
    %v243 = vpop.f32.mrf.mxu0
    %v244 = vadd.f32 0.0, %v243
    %v245 = vpop.f32.mrf.mxu0
    %v246 = vadd.f32 0.0, %v245
    %247 = vmatmul.bf16.gmra.mxu0 %v167
    %v248 = vpop.f32.mrf.mxu0
    %v249 = vadd.f32 0.0, %v248
    %v250 = vpop.f32.mrf.mxu0
    %v251 = vadd.f32 0.0, %v250
    %252 = vmatmul.bf16.gmra.mxu0 %v168
    %v253 = vpop.f32.mrf.mxu0
    %v254 = vadd.f32 0.0, %v253
    %v255 = vpop.f32.mrf.mxu0
    %v256 = vadd.f32 0.0, %v255
    %257 = vmatmul.bf16.gmra.mxu0 %v169
    %v258 = vpop.f32.mrf.mxu0
    %v259 = vadd.f32 0.0, %v258
    %v260 = vpop.f32.mrf.mxu0
    %v261 = vadd.f32 0.0, %v260
    %262 = vmatmul.bf16.gmra.mxu0 %v170
    %v263 = vpop.f32.mrf.mxu0
    %v264 = vadd.f32 0.0, %v263
    %v265 = vpop.f32.mrf.mxu0
    %v266 = vadd.f32 0.0, %v265
    %267 = vmatmul.bf16.gmra.mxu0 %v171
    %v268 = vpop.f32.mrf.mxu0
    %v269 = vadd.f32 0.0, %v268
    %v270 = vpop.f32.mrf.mxu0
    %v271 = vadd.f32 0.0, %v270
    %272 = vmatmul.bf16.gmra.mxu0 %v172
    %v273 = vpop.f32.mrf.mxu0
    %v274 = vadd.f32 0.0, %v273
    %v275 = vpop.f32.mrf.mxu0
    %v276 = vadd.f32 0.0, %v275
    %277 = vdwg.mxu0
    %v278 = vadd.f32 %v85, %v239
    %v279 = vadd.f32 %v86, %v241
    %v280 = vadd.f32 %v87, %v244
    %v281 = vadd.f32 %v88, %v246
    %v282 = vadd.f32 %v89, %v249
    %v283 = vadd.f32 %v90, %v251
    %v284 = vadd.f32 %v91, %v254
    %v285 = vadd.f32 %v92, %v256
    %v286 = vadd.f32 %v93, %v259
    %v287 = vadd.f32 %v94, %v261
    %v288 = vadd.f32 %v95, %v264
    %v289 = vadd.f32 %v96, %v266
    %v290 = vadd.f32 %v97, %v269
    %v291 = vadd.f32 %v98, %v271
    %v292 = vadd.f32 %v99, %v274
    %v293 = vadd.f32 %v100, %v276
    %294 = vst [vmem:[#allocation2] sm:$0xff] %v278
    %295 = vst [vmem:[#allocation2 + $0x8] sm:$0xff] %v279
    %296 = vst [vmem:[#allocation2 + $0x10] sm:$0xff] %v280
    %297 = vst [vmem:[#allocation2 + $0x18] sm:$0xff] %v281
    %298 = vst [vmem:[#allocation2 + $0x20] sm:$0xff] %v282
    %299 = vst [vmem:[#allocation2 + $0x28] sm:$0xff] %v283
    %300 = vst [vmem:[#allocation2 + $0x30] sm:$0xff] %v284
    %301 = vst [vmem:[#allocation2 + $0x38] sm:$0xff] %v285
    %302 = vst [vmem:[#allocation2 + $0x40] sm:$0xff] %v286
    %303 = vst [vmem:[#allocation2 + $0x48] sm:$0xff] %v287
    %304 = vst [vmem:[#allocation2 + $0x50] sm:$0xff] %v288
    %305 = vst [vmem:[#allocation2 + $0x58] sm:$0xff] %v289
    %306 = vst [vmem:[#allocation2 + $0x60] sm:$0xff] %v290
    %307 = vst [vmem:[#allocation2 + $0x68] sm:$0xff] %v291
    %308 = vst [vmem:[#allocation2 + $0x70] sm:$0xff] %v292
    %309 = vst [vmem:[#allocation2 + $0x78] sm:$0xff] %v293
    // Predicated region
    $region34: #{tpu_custom_call.1} parent=1 // pred_check
      %p310 = pneg %p65
    $region35: #{tpu_custom_call.1} parent=1 // pred_check_branch
      %312 = sbr.rel (%p310) target = $region37
    $region36: #{tpu_custom_call.1} parent=1 // pred_region
      %v313 = vld [vmem:[#allocation2] sm:$0xff]
      %v314 = vld [vmem:[#allocation2 + $0x8] sm:$0xff]
      %v315 = vld [vmem:[#allocation2 + $0x10] sm:$0xff]
      %v316 = vld [vmem:[#allocation2 + $0x18] sm:$0xff]
      %v317 = vld [vmem:[#allocation2 + $0x20] sm:$0xff]
      %v318 = vld [vmem:[#allocation2 + $0x28] sm:$0xff]
      %v319 = vld [vmem:[#allocation2 + $0x30] sm:$0xff]
      %v320 = vld [vmem:[#allocation2 + $0x38] sm:$0xff]
      %v321 = vld [vmem:[#allocation2 + $0x40] sm:$0xff]
      %v322 = vld [vmem:[#allocation2 + $0x48] sm:$0xff]
      %v323 = vld [vmem:[#allocation2 + $0x50] sm:$0xff]
      %v324 = vld [vmem:[#allocation2 + $0x58] sm:$0xff]
      %v325 = vld [vmem:[#allocation2 + $0x60] sm:$0xff]
      %v326 = vld [vmem:[#allocation2 + $0x68] sm:$0xff]
      %v327 = vld [vmem:[#allocation2 + $0x70] sm:$0xff]
      %v328 = vld [vmem:[#allocation2 + $0x78] sm:$0xff]
      %v329 = vld [vmem:[%s2] sm:$0x1]
      %v331 = vperm.slane %v329, 0
      %v333 = vadd.f32 %v313, %v331
      %v334 = vadd.f32 %v314, %v331
      %v335 = vadd.f32 %v315, %v331
      %v336 = vadd.f32 %v316, %v331
      %v337 = vadd.f32 %v317, %v331
      %v338 = vadd.f32 %v318, %v331
      %v339 = vadd.f32 %v319, %v331
      %v340 = vadd.f32 %v320, %v331
      %v341 = vadd.f32 %v321, %v331
      %v342 = vadd.f32 %v322, %v331
      %v343 = vadd.f32 %v323, %v331
      %v344 = vadd.f32 %v324, %v331
      %v345 = vadd.f32 %v325, %v331
      %v346 = vadd.f32 %v326, %v331
      %v347 = vadd.f32 %v327, %v331
      %v348 = vadd.f32 %v328, %v331
      %v349 = vmax.f32 %v333, 0.0
      %v350 = vmax.f32 %v334, 0.0
      %v351 = vmax.f32 %v335, 0.0
      %v352 = vmax.f32 %v336, 0.0
      %v353 = vmax.f32 %v337, 0.0
      %v354 = vmax.f32 %v338, 0.0
      %v355 = vmax.f32 %v339, 0.0
      %v356 = vmax.f32 %v340, 0.0
      %v357 = vmax.f32 %v341, 0.0
      %v358 = vmax.f32 %v342, 0.0
      %v359 = vmax.f32 %v343, 0.0
      %v360 = vmax.f32 %v344, 0.0
      %v361 = vmax.f32 %v345, 0.0
      %v362 = vmax.f32 %v346, 0.0
      %v363 = vmax.f32 %v347, 0.0
      %v364 = vmax.f32 %v348, 0.0
      %v365 = vpack.c.bf16 %v350, %v349
      %v366 = vpack.c.bf16 %v352, %v351
      %v367 = vpack.c.bf16 %v354, %v353
      %v368 = vpack.c.bf16 %v356, %v355
      %v369 = vpack.c.bf16 %v358, %v357
      %v370 = vpack.c.bf16 %v360, %v359
      %v371 = vpack.c.bf16 %v362, %v361
      %v372 = vpack.c.bf16 %v364, %v363
      %v373 = vld [vmem:[#allocation8] sm:$0xf]
      %v374 = vld [vmem:[#allocation8 + $0x4] sm:$0xf]
      %v375 = vld [vmem:[#allocation8 + $0x8] sm:$0xf]
      %v376 = vld [vmem:[#allocation8 + $0xc] sm:$0xf]
      %v377 = vld [vmem:[#allocation8 + $0x10] sm:$0xf]
      %v378 = vld [vmem:[#allocation8 + $0x14] sm:$0xf]
      %v379 = vld [vmem:[#allocation8 + $0x18] sm:$0xf]
      %v380 = vld [vmem:[#allocation8 + $0x1c] sm:$0xf]
      %v381 = vld [vmem:[#allocation8 + $0x20] sm:$0xf]
      %v382 = vld [vmem:[#allocation8 + $0x24] sm:$0xf]
      %v383 = vld [vmem:[#allocation8 + $0x28] sm:$0xf]
      %v384 = vld [vmem:[#allocation8 + $0x2c] sm:$0xf]
      %v385 = vld [vmem:[#allocation8 + $0x30] sm:$0xf]
      %v386 = vld [vmem:[#allocation8 + $0x34] sm:$0xf]
      %v387 = vld [vmem:[#allocation8 + $0x38] sm:$0xf]
      %v388 = vld [vmem:[#allocation8 + $0x3c] sm:$0xf]
      %v405 = vunpack.c.l.b16 %v373
      %v406 = vunpack.c.l.b16 %v374
      %v407 = vunpack.c.l.b16 %v375
      %v408 = vunpack.c.l.b16 %v376
      %v409 = vunpack.c.l.b16 %v377
      %v410 = vunpack.c.l.b16 %v378
      %v411 = vunpack.c.l.b16 %v379
      %v412 = vunpack.c.l.b16 %v380
      %v413 = vunpack.c.l.b16 %v381
      %v414 = vunpack.c.l.b16 %v382
      %v415 = vunpack.c.l.b16 %v383
      %v416 = vunpack.c.l.b16 %v384
      %v417 = vunpack.c.l.b16 %v385
      %v418 = vunpack.c.l.b16 %v386
      %v419 = vunpack.c.l.b16 %v387
      %v420 = vunpack.c.l.b16 %v388
      %v421 = vpack.c.b16 %v406, %v405
      %v422 = vpack.c.b16 %v408, %v407
      %v423 = vpack.c.b16 %v410, %v409
      %v424 = vpack.c.b16 %v412, %v411
      %v425 = vpack.c.b16 %v414, %v413
      %v426 = vpack.c.b16 %v416, %v415
      %v427 = vpack.c.b16 %v418, %v417
      %v428 = vpack.c.b16 %v420, %v419
      %437 = vmatpush.bf16.msra.mxu0 %v428
      %438 = vmatpush.bf16.msra.mxu0 %v427
      %439 = vmatpush.bf16.msra.mxu0 %v426
      %440 = vmatpush.bf16.msra.mxu0 %v425
      %441 = vmatpush.bf16.msra.mxu0 %v424
      %442 = vmatpush.bf16.msra.mxu0 %v423
      %443 = vmatpush.bf16.msra.mxu0 %v422
      %444 = vmatpush.bf16.msra.mxu0 %v421
      %445 = vmatmul.bf16.gmra.mxu0 %v365
      %v446 = vpop.f32.mrf.mxu0
      %v447 = vadd.f32 0.0, %v446
      %v448 = vpop.f32.mrf.mxu0
      %v449 = vadd.f32 0.0, %v448
      %450 = vmatmul.bf16.gmra.mxu0 %v366
      %v451 = vpop.f32.mrf.mxu0
      %v452 = vadd.f32 0.0, %v451
      %v453 = vpop.f32.mrf.mxu0
      %v454 = vadd.f32 0.0, %v453
      %455 = vmatmul.bf16.gmra.mxu0 %v367
      %v456 = vpop.f32.mrf.mxu0
      %v457 = vadd.f32 0.0, %v456
      %v458 = vpop.f32.mrf.mxu0
      %v459 = vadd.f32 0.0, %v458
      %460 = vmatmul.bf16.gmra.mxu0 %v368
      %v461 = vpop.f32.mrf.mxu0
      %v462 = vadd.f32 0.0, %v461
      %v463 = vpop.f32.mrf.mxu0
      %v464 = vadd.f32 0.0, %v463
      %465 = vmatmul.bf16.gmra.mxu0 %v369
      %v466 = vpop.f32.mrf.mxu0
      %v467 = vadd.f32 0.0, %v466
      %v468 = vpop.f32.mrf.mxu0
      %v469 = vadd.f32 0.0, %v468
      %470 = vmatmul.bf16.gmra.mxu0 %v370
      %v471 = vpop.f32.mrf.mxu0
      %v472 = vadd.f32 0.0, %v471
      %v473 = vpop.f32.mrf.mxu0
      %v474 = vadd.f32 0.0, %v473
      %475 = vmatmul.bf16.gmra.mxu0 %v371
      %v476 = vpop.f32.mrf.mxu0
      %v477 = vadd.f32 0.0, %v476
      %v478 = vpop.f32.mrf.mxu0
      %v479 = vadd.f32 0.0, %v478
      %480 = vmatmul.bf16.gmra.mxu0 %v372
      %v481 = vpop.f32.mrf.mxu0
      %v482 = vadd.f32 0.0, %v481
      %v483 = vpop.f32.mrf.mxu0
      %v484 = vadd.f32 0.0, %v483
      %485 = vdwg.mxu0
      %v486 = vpack.c.bf16 %v447, %v447
      %v487 = vpack.c.bf16 %v449, %v449
      %v488 = vpack.c.bf16 %v452, %v452
      %v489 = vpack.c.bf16 %v454, %v454
      %v490 = vpack.c.bf16 %v457, %v457
      %v491 = vpack.c.bf16 %v459, %v459
      %v492 = vpack.c.bf16 %v462, %v462
      %v493 = vpack.c.bf16 %v464, %v464
      %v494 = vpack.c.bf16 %v467, %v467
      %v495 = vpack.c.bf16 %v469, %v469
      %v496 = vpack.c.bf16 %v472, %v472
      %v497 = vpack.c.bf16 %v474, %v474
      %v498 = vpack.c.bf16 %v477, %v477
      %v499 = vpack.c.bf16 %v479, %v479
      %v500 = vpack.c.bf16 %v482, %v482
      %v501 = vpack.c.bf16 %v484, %v484
      %502 = vst [vmem:[#allocation9] sm:$0xf] %v486
      %503 = vst [vmem:[#allocation9 + $0x4] sm:$0xf] %v487
      %504 = vst [vmem:[#allocation9 + $0x8] sm:$0xf] %v488
      %505 = vst [vmem:[#allocation9 + $0xc] sm:$0xf] %v489
      %506 = vst [vmem:[#allocation9 + $0x10] sm:$0xf] %v490
      %507 = vst [vmem:[#allocation9 + $0x14] sm:$0xf] %v491
      %508 = vst [vmem:[#allocation9 + $0x18] sm:$0xf] %v492
      %509 = vst [vmem:[#allocation9 + $0x1c] sm:$0xf] %v493
      %510 = vst [vmem:[#allocation9 + $0x20] sm:$0xf] %v494
      %511 = vst [vmem:[#allocation9 + $0x24] sm:$0xf] %v495
      %512 = vst [vmem:[#allocation9 + $0x28] sm:$0xf] %v496
      %513 = vst [vmem:[#allocation9 + $0x2c] sm:$0xf] %v497
      %514 = vst [vmem:[#allocation9 + $0x30] sm:$0xf] %v498
      %515 = vst [vmem:[#allocation9 + $0x34] sm:$0xf] %v499
      %516 = vst [vmem:[#allocation9 + $0x38] sm:$0xf] %v500
      %517 = vst [vmem:[#allocation9 + $0x3c] sm:$0xf] %v501
    $region37: #{tpu_custom_call.1} parent=1 // pred_fallthru
      _
    // Predicated region
    $region38: #{tpu_custom_call.1} parent=1 // pred_check
      _
    $region39: #{tpu_custom_call.1} parent=1 // pred_check_branch
      %519 = sbr.rel (0) target = $region41
    $region40: #{tpu_custom_call.1} parent=1 // pred_region
      %521 = vsyncadd [#allocation5], 0
      %s522 = sshll.u32 [#allocation9], 4
      %s523 = int_to_ptr.vmem [resolvable:$true] %s522
      %s524 = sshll.u32 %s4, 4
      %s525 = int_to_ptr.hbm [resolvable:$true] %s524
      %530 = dma.vmem_to_hbm [thread:$0]  %s523, 1024, %s525, [#allocation5], 64, 64, 4
    $region41: #{tpu_custom_call.1} parent=1 // pred_fallthru
      _
    // Predicated region
    $region42: #{tpu_custom_call.1} parent=1 // pred_check
      _
    $region43: #{tpu_custom_call.1} parent=1 // pred_check_branch
      %532 = sbr.rel (0) target = $region45
    $region44: #{tpu_custom_call.1} parent=1 // pred_region
      %534 = dma.done [#allocation5], 1024
    $region45: #{tpu_custom_call.1} parent=1 // pred_fallthru
      _
    %535 = vsyncpa [#allocation4], 1
    %536 = vsyncpa [#allocation7], 1
    %537 = vsyncpa [#allocation5], 1

</llo_original>
